<compile_context>
chip_gen: v7x
topology: tpu7x:2x2x1
jax: 0.10.0
libtpu: 0.0.40
codegen_flags: <defaults>
</compile_context>

<pallas_src>
import math

import jax
import jax.numpy as jnp
from jax.experimental import pallas as pl
from jax.experimental.pallas import tpu as pltpu


def _layer_scale_kernel(x_ref, gamma_ref, o_ref):
    # x_ref:     (tile_rows, L) block of the flattened input
    # gamma_ref: (1, L) scale vector, broadcast over rows (VMEM-resident)
    o_ref[...] = x_ref[...] * gamma_ref[...]


def _sublane_pack(dtype) -> int:
    # Rows per packed vreg sublane group: 8 f32, 16 bf16, 32 int8/fp8.
    return max(8, 32 // jnp.dtype(dtype).itemsize)


def layer_scale(
    x: jax.Array,
    gamma: jax.Array,
    *,
    target_block_bytes: int = 4 * 1024 * 1024,
) -> jax.Array:
    """Apply LayerScale: x * gamma (gamma broadcast over all but the last dim)."""
    orig_shape = x.shape
    D = orig_shape[-1]
    assert gamma.shape == (D,), f"gamma must have shape ({D},), got {gamma.shape}"

    # Compute in x's dtype (matches `x * gamma` output dtype for ViT usage).
    gamma = gamma.astype(x.dtype)
    total = x.size

    # --- choose a lane-dense 2-D view --------------------------------------
    if D % 128 == 0:
        L = D
        gamma_row = gamma
    else:
        L = math.lcm(D, 128)
        if total % L == 0:
            # Re-view contiguous data as (-1, L); gamma repeats every D lanes.
            gamma_row = jnp.tile(gamma, L // D)
        else:
            # Fallback: keep D as the lane dim (full-dim block is always legal,
            # stores become masked but correctness is preserved).
            L = D
            gamma_row = gamma

    x2 = x.reshape(-1, L)
    rows = x2.shape[0]
    gamma2 = gamma_row.reshape(1, L)

    # --- choose tile_rows by bytes, aligned to the sublane pack -------------
    itemsize = jnp.dtype(x.dtype).itemsize
    row_bytes = L * itemsize
    pack = _sublane_pack(x.dtype)
    tile_rows = max(pack, (target_block_bytes // row_bytes) // pack * pack)
    if tile_rows >= rows:
        # Single block covering everything (block == full dim is always legal).
        tile_rows = rows
        grid = (1,)
    else:
        grid = (pl.cdiv(rows, tile_rows),)

    # --- VMEM budget: double-buffered x + out blocks + gamma + margin -------
    block_bytes = tile_rows * row_bytes
    vmem_needed = 4 * block_bytes + 2 * row_bytes + (1 << 20)
    vmem_limit = min(max(vmem_needed, 16 * 1024 * 1024), 48 * 1024 * 1024)

    out = pl.pallas_call(
        _layer_scale_kernel,
        out_shape=jax.ShapeDtypeStruct((rows, L), x.dtype),
        grid_spec=pltpu.PrefetchScalarGridSpec(
            num_scalar_prefetch=0,
            grid=grid,
            in_specs=[
                pl.BlockSpec((tile_rows, L), lambda i: (i, 0)),
                pl.BlockSpec((1, L), lambda i: (0, 0)),  # resident across steps
            ],
            out_specs=pl.BlockSpec((tile_rows, L), lambda i: (i, 0)),
        ),
        compiler_params=pltpu.CompilerParams(
            dimension_semantics=("parallel",),
            vmem_limit_bytes=int(vmem_limit),
        ),
    )(x2, gamma2)

    return out.reshape(orig_shape)


if __name__ == "__main__":
    # Deterministic setup mirroring LayerScale(dim=32, init_values=1e-5).
    B, N, D = 2, 8, 32
    init_values = 1e-5

    key = jax.random.PRNGKey(0)
    x = jax.random.normal(key, (B, N, D), dtype=jnp.float32)
    gamma = jnp.full((D,), init_values, dtype=jnp.float32)  # init_values * ones(dim)

    out = layer_scale(x, gamma)
    out = jax.block_until_ready(out)

    ref = x * gamma
    assert out.shape == x.shape
    assert out.dtype == x.dtype
    assert jnp.allclose(out, ref, atol=0, rtol=0), "mismatch vs reference"

    # Robustness: token count not divisible by the lane-dense lcm view
    # (exercises the fallback full-dim-block path).
    x2 = jax.random.normal(jax.random.PRNGKey(1), (2, 7, D), dtype=jnp.float32)
    out2 = jax.block_until_ready(layer_scale(x2, gamma))
    assert jnp.allclose(out2, x2 * gamma, atol=0, rtol=0), "mismatch vs reference (ragged)"

    # Robustness: bf16 path with a 128-multiple hidden dim (typical ViT width).
    x3 = jax.random.normal(jax.random.PRNGKey(2), (2, 8, 384), dtype=jnp.bfloat16)
    g3 = jnp.full((384,), init_values, dtype=jnp.float32)
    out3 = jax.block_until_ready(layer_scale(x3, g3))
    assert jnp.allclose(out3, x3 * g3.astype(jnp.bfloat16)), "mismatch vs reference (bf16)"

    print("KERNEL_OK")
</pallas_src>

<mosaic_0001>
module attributes {stable_mosaic.version = 11 : i64} {
  func.func @_layer_scale_kernel(%arg0: i32, %arg1: memref<4x128xf32, #tpu.memory_space<vmem>>, %arg2: memref<1x128xf32, #tpu.memory_space<vmem>>, %arg3: memref<4x128xf32, #tpu.memory_space<vmem>>) attributes {dimension_semantics = [#tpu.dimension_semantics<parallel>], iteration_bounds = array<i64: 1>, scalar_prefetch = 0 : i64, scratch_operands = 0 : i64, tpu.core_type = #tpu.core_type<tc>, window_params = [{transform_indices = @transform_0, window_bounds = array<i64: 4, 128>}, {pipeline_mode = #tpu.pipeline_mode<synchronous>, transform_indices = @transform_1, window_bounds = array<i64: 1, 128>}, {transform_indices = @transform_2, window_bounds = array<i64: 4, 128>}]} {
    %c0 = arith.constant 0 : index
    %c0_0 = arith.constant 0 : index
    %0 = vector.load %arg1[%c0, %c0_0] : memref<4x128xf32, #tpu.memory_space<vmem>>, vector<4x128xf32>
    %c0_1 = arith.constant 0 : index
    %c0_2 = arith.constant 0 : index
    %1 = vector.load %arg2[%c0_1, %c0_2] : memref<1x128xf32, #tpu.memory_space<vmem>>, vector<1x128xf32>
    %2 = vector.broadcast %1 : vector<1x128xf32> to vector<4x128xf32>
    %3 = arith.mulf %0, %2 : vector<4x128xf32>
    %c0_3 = arith.constant 0 : index
    %c0_4 = arith.constant 0 : index
    %4 = vector.load %arg3[%c0_3, %c0_4] : memref<4x128xf32, #tpu.memory_space<vmem>>, vector<4x128xf32>
    tpu.vector_store %arg3[%c0_3, %c0_4], %3 {strides = array<i32>} : memref<4x128xf32, #tpu.memory_space<vmem>>, vector<4x128xf32>,
    return
  }
  func.func @transform_0(%arg0: i32) -> (i32, i32) {
    %c0_i32 = arith.constant 0 : i32
    %c0_i32_0 = arith.constant 0 : i32
    return %arg0, %c0_i32 : i32, i32
  }
  func.func @transform_1(%arg0: i32) -> (i32, i32) {
    %c0_i32 = arith.constant 0 : i32
    %c0_i32_0 = arith.constant 0 : i32
    %c0_i32_1 = arith.constant 0 : i32
    return %c0_i32, %c0_i32_0 : i32, i32
  }
  func.func @transform_2(%arg0: i32) -> (i32, i32) {
    %c0_i32 = arith.constant 0 : i32
    %c0_i32_0 = arith.constant 0 : i32
    return %arg0, %c0_i32 : i32, i32
  }
}

</mosaic_0001>

<llo_original>
// kernel: tpu_custom_call.1
$region0: #{tpu_custom_call.1}
  #allocation0 [shape = 'u32[]', space=smem, size = 0x4, offset = 0x4, fixed_abs, tag = 'smem constant byte address 0x4 - core index']
  #allocation1 [shape = 'u32[144,128]{1,0:T(1,128)}', space=vmem, size = 0x12000, scoped, tag = 'internal scratch']
  %s0 = inlined_call_operand.hbm [shape: f32[4,128], index: 0, kind: input, shape index: {}]
  %s1 = inlined_call_operand.vmem [shape: f32[1,128], index: 1, kind: input, shape index: {}]
  %s2 = inlined_call_operand.hbm [shape: f32[4,128], index: 2, kind: output, shape index: {}]
  %s3 = sld [smem:[#allocation0]]
  $region22: #{tpu_custom_call.1} parent=0
    _
  %s5 = ssub.s32 1, %s3
  %s6 = scalar_select 0, %s5, %s3
  $region1: #{tpu_custom_call.1} parent=0
    #allocation2 [shape = 'u8[2048]{0}', space=vmem, size = 0x800, scoped, tag = 'input window, operand 0, single buffered']
    #allocation3 [shape = 's32[1]{0}', space=sflag, size = 0x4, scoped, tag = 'scoped memory for tpu_custom_call.1']
    #allocation4 [shape = 's32[1]{0}', space=sflag, size = 0x4, scoped, tag = 'scoped memory for tpu_custom_call.1']
    #allocation5 [shape = 'u8[2048]{0}', space=vmem, size = 0x800, scoped, tag = 'output window, operand 0, single buffered']
    %7 = vsyncpa [#allocation3], 0
    %8 = vsyncpa [#allocation4], 0
    // Predicated region
    $region2: #{tpu_custom_call.1} parent=1 // pred_check
      _
    $region3: #{tpu_custom_call.1} parent=1 // pred_check_branch
      %10 = sbr.rel (0) target = $region5
    $region4: #{tpu_custom_call.1} parent=1 // pred_region
      %s12 = ssub.s32 64, 64
      %13 = vsyncadd [#allocation3], %s12
      %s15 = sshll.u32 [#allocation2], 4
      %s16 = int_to_ptr.vmem [resolvable:$true] %s15
      %18 = dma.hbm_to_vmem [thread:$0]  %s0, 64, %s16, [#allocation3]
    $region5: #{tpu_custom_call.1} parent=1 // pred_fallthru
      _
    // Predicated region
    $region6: #{tpu_custom_call.1} parent=1 // pred_check
      _
    $region7: #{tpu_custom_call.1} parent=1 // pred_check_branch
      %20 = sbr.rel (0) target = $region9
    $region8: #{tpu_custom_call.1} parent=1 // pred_region
      _
    $region9: #{tpu_custom_call.1} parent=1 // pred_fallthru
      _
    // Predicated region
    $region10: #{tpu_custom_call.1} parent=1 // pred_check
      _
    $region11: #{tpu_custom_call.1} parent=1 // pred_check_branch
      %22 = sbr.rel (0) target = $region13
    $region12: #{tpu_custom_call.1} parent=1 // pred_region
      %23 = dma.done [#allocation3], 64
    $region13: #{tpu_custom_call.1} parent=1 // pred_fallthru
      _
    %v24 = vld [vmem:[#allocation2] sm:$0xf]
    %v25 = vld [vmem:[%s1] sm:$0x1]
    %v27 = vlaneseq
    %v28 = vshrl.u32 %v27, 7
    %v29 = vsub.s32 0, %v28
    %v30 = vrot.slane %v25, %v29
    %v32 = vmul.f32 %v24, %v30
    %33 = vst [vmem:[#allocation5] sm:$0xf] %v32
    // Predicated region
    $region14: #{tpu_custom_call.1} parent=1 // pred_check
      _
    $region15: #{tpu_custom_call.1} parent=1 // pred_check_branch
      %35 = sbr.rel (0) target = $region17
    $region16: #{tpu_custom_call.1} parent=1 // pred_region
      %s37 = ssub.s32 64, 64
      %38 = vsyncadd [#allocation4], %s37
      %s40 = sshll.u32 [#allocation5], 4
      %s41 = int_to_ptr.vmem [resolvable:$true] %s40
      %43 = dma.vmem_to_hbm [thread:$0]  %s41, 64, %s2, [#allocation4]
    $region17: #{tpu_custom_call.1} parent=1 // pred_fallthru
      _
    // Predicated region
    $region18: #{tpu_custom_call.1} parent=1 // pred_check
      _
    $region19: #{tpu_custom_call.1} parent=1 // pred_check_branch
      %45 = sbr.rel (0) target = $region21
    $region20: #{tpu_custom_call.1} parent=1 // pred_region
      %46 = dma.done [#allocation4], 64
    $region21: #{tpu_custom_call.1} parent=1 // pred_fallthru
      _
    %47 = vsyncpa [#allocation3], 1
    %48 = vsyncpa [#allocation4], 1

</llo_original>
